<compile_context>
chip_gen: v5e
topology: v5e:2x2
jax: 0.10.0
libtpu: 0.0.40
codegen_flags: <defaults>
</compile_context>

<pallas_src>
import functools

import jax
import jax.numpy as jnp
from jax.experimental import pallas as pl
from jax.experimental.pallas import tpu as pltpu


def _round8(n):
    return ((n + 7) // 8) * 8


def pack_params(params):
    """Pack (W1,b1),(W2,b2),(W3,b3) into one f32 slab.

    Each segment starts on a sublane-aligned (multiple-of-8) row so in-kernel
    static slices don't straddle (8,128) tiles. Returns (slab, layout) with
    layout = ((w_row, f_in, f_out, b_row), ...) of static Python ints.
    """
    max_cols = max(w.shape[1] for (w, _) in params)
    row = 0
    placements = []
    layout = []
    for (w, b) in params:
        f_in, f_out = w.shape
        w_row = row
        placements.append((w_row, jnp.asarray(w, jnp.float32)))
        row += _round8(f_in)
        b_row = row
        placements.append((b_row, jnp.asarray(b, jnp.float32).reshape(1, f_out)))
        row += 8
        layout.append((w_row, f_in, f_out, b_row))
    slab = jnp.zeros((row, max_cols), jnp.float32)
    for (r, a) in placements:
        slab = slab.at[r:r + a.shape[0], :a.shape[1]].set(a)
    return slab, tuple(layout)


def _gcn_kernel(x_ref, adj_ref, slab_ref, out_ref, *, layout):
    """Fused 3-layer GCN for a single graph (whole graph resident in VMEM)."""
    adj = adj_ref[...]           # (N, N) f32, loaded once, reused by all layers
    h = x_ref[...]               # (N, F_in) f32
    n_layers = len(layout)
    for i, (w_row, f_in, f_out, b_row) in enumerate(layout):
        w = slab_ref[w_row:w_row + f_in, 0:f_out]     # static, sublane-aligned
        b = slab_ref[b_row:b_row + 1, 0:f_out]
        support = jnp.dot(h, w, preferred_element_type=jnp.float32)
        h = jnp.dot(adj, support, preferred_element_type=jnp.float32) + b
        if i < n_layers - 1:
            h = jnp.maximum(h, 0.0)
        # F.dropout(training=False) is identity (eval-mode inference).
    out_ref[...] = h.astype(out_ref.dtype)


def _gcn_batched_kernel(x_ref, adj_ref, slab_ref, out_ref, *, layout):
    """Fused 3-layer GCN over a block of Bt graphs per grid step."""
    adj = adj_ref[...]           # (Bt, N, N)
    h = x_ref[...]               # (Bt, N, F_in)
    bt, n, _ = h.shape
    n_layers = len(layout)
    for i, (w_row, f_in, f_out, b_row) in enumerate(layout):
        w = slab_ref[w_row:w_row + f_in, 0:f_out]
        b = slab_ref[b_row:b_row + 1, 0:f_out]
        # Shared weights: one big (Bt*N, F_in)@(F_in, F_out) matmul.
        support = jnp.dot(h.reshape(bt * n, f_in), w,
                          preferred_element_type=jnp.float32).reshape(bt, n, f_out)
        h = jnp.einsum('bij,bjf->bif', adj, support,
                       preferred_element_type=jnp.float32) + b
        if i < n_layers - 1:
            h = jnp.maximum(h, 0.0)
    out_ref[...] = h.astype(out_ref.dtype)


def gcn_forward(x, adj, params, dropout_p=0.5, training=False):
    """Fused 3-layer GCN forward for one graph: relu(gc1)->relu(gc2)->gc3."""
    # TODO(synk): training-mode dropout (pltpu.prng_seed + prng_random_bits mask).
    assert not training, "training-mode dropout not implemented (eval mode only)"
    del dropout_p
    slab, layout = pack_params(params)
    n = x.shape[0]
    f_out = params[-1][0].shape[1]
    kernel = functools.partial(_gcn_kernel, layout=layout)
    return pl.pallas_call(
        kernel,
        out_shape=jax.ShapeDtypeStruct((n, f_out), jnp.float32),
        # Single grid point; whole-array blocks (== full shape, so legal).
        in_specs=[pl.BlockSpec(x.shape, lambda: (0, 0)),
                  pl.BlockSpec(adj.shape, lambda: (0, 0)),
                  pl.BlockSpec(slab.shape, lambda: (0, 0))],
        out_specs=pl.BlockSpec((n, f_out), lambda: (0, 0)),
    )(x, adj, slab)


def gcn_forward_batched(x, adj, params, *, graphs_per_step=4,
                        dropout_p=0.5, training=False):
    """Batched variant: x (B,N,F), adj (B,N,N). Amortizes launch/DMA overhead
    over many small graphs; batch axis is 'parallel' (megacore on v7x)."""
    assert not training, "training-mode dropout not implemented (eval mode only)"
    del dropout_p
    slab, layout = pack_params(params)
    b_total, n, f_in = x.shape
    f_out = params[-1][0].shape[1]
    bt = min(graphs_per_step, b_total)
    assert b_total % bt == 0, "batch must be divisible by graphs_per_step"
    kernel = functools.partial(_gcn_batched_kernel, layout=layout)
    return pl.pallas_call(
        kernel,
        out_shape=jax.ShapeDtypeStruct((b_total, n, f_out), jnp.float32),
        grid=(b_total // bt,),
        in_specs=[pl.BlockSpec((bt, n, f_in), lambda b: (b, 0, 0)),
                  pl.BlockSpec((bt, n, n), lambda b: (b, 0, 0)),
                  # Constant block index -> weight slab stays VMEM-resident.
                  pl.BlockSpec(slab.shape, lambda b: (0, 0))],
        out_specs=pl.BlockSpec((bt, n, f_out), lambda b: (b, 0, 0)),
        compiler_params=pltpu.CompilerParams(dimension_semantics=("parallel",)),
    )(x, adj, slab)


def init_gcn_params(key, nfeat, nhid):
    """Deterministic init matching GraphConvolution.reset_parameters:
    uniform(-stdv, stdv), stdv = 1/sqrt(F_out). Layer dims per GCN.__init__."""
    dims = [(nfeat, nhid), (nhid, 32), (32, 16)]
    params = []
    for (fi, fo) in dims:
        key, kw, kb = jax.random.split(key, 3)
        stdv = 1.0 / jnp.sqrt(jnp.float32(fo))
        w = jax.random.uniform(kw, (fi, fo), jnp.float32, -stdv, stdv)
        b = jax.random.uniform(kb, (1, fo), jnp.float32, -stdv, stdv)
        params.append((w, b))
    return params


def _normalized_adj(key, shape):
    """Symmetric, row-normalized dense adjacency with self-loops."""
    a = jax.random.uniform(key, shape, jnp.float32)
    a = (a + jnp.swapaxes(a, -1, -2)) * 0.5 + jnp.eye(shape[-1], dtype=jnp.float32)
    return a / jnp.sum(a, axis=-1, keepdims=True)


if __name__ == "__main__":
    key = jax.random.PRNGKey(0)
    N, NFEAT, NHID, B = 8, 16, 32, 8  # small graphs: 8 nodes, 16 input features

    k_x, k_adj, k_p, k_bx, k_badj = jax.random.split(key, 5)
    x = jax.random.normal(k_x, (N, NFEAT), jnp.float32)
    adj = _normalized_adj(k_adj, (N, N))
    params = init_gcn_params(k_p, NFEAT, NHID)

    # Pure-JAX reference (same math/order as the PyTorch module, eval mode).
    def ref(x, adj, params):
        (w1, b1), (w2, b2), (w3, b3) = params
        h = jnp.maximum(adj @ (x @ w1) + b1, 0.0)
        h = jnp.maximum(adj @ (h @ w2) + b2, 0.0)
        return adj @ (h @ w3) + b3

    # 1) Single-graph fused kernel.
    expected = ref(x, adj, params)
    out = gcn_forward(x, adj, params)
    jax.block_until_ready(out)
    assert out.shape == (N, 16)
    assert jnp.allclose(out, expected, atol=1e-4, rtol=1e-4)

    # 2) Batched kernel (B graphs, Bt per grid step, batch axis parallel).
    xb = jax.random.normal(k_bx, (B, N, NFEAT), jnp.float32)
    adjb = _normalized_adj(k_badj, (B, N, N))
    expected_b = jax.vmap(lambda xg, ag: ref(xg, ag, params))(xb, adjb)
    out_b = gcn_forward_batched(xb, adjb, params, graphs_per_step=4)
    jax.block_until_ready(out_b)
    assert out_b.shape == (B, N, 16)
    assert jnp.allclose(out_b, expected_b, atol=1e-4, rtol=1e-4)

    print("KERNEL_OK")
</pallas_src>

<mosaic_0001>
module attributes {stable_mosaic.version = 11 : i64} {
  func.func @_gcn_kernel(%arg0: memref<8x16xf32, #tpu.memory_space<vmem>>, %arg1: memref<8x8xf32, #tpu.memory_space<vmem>>, %arg2: memref<104x32xf32, #tpu.memory_space<vmem>>, %arg3: memref<8x16xf32, #tpu.memory_space<vmem>>) attributes {dimension_semantics = [], scalar_prefetch = 0 : i64, scratch_operands = 0 : i64, tpu.core_type = #tpu.core_type<tc>} {
    %c0 = arith.constant 0 : index
    %c0_0 = arith.constant 0 : index
    %0 = vector.load %arg1[%c0, %c0_0] : memref<8x8xf32, #tpu.memory_space<vmem>>, vector<8x8xf32>
    %c0_1 = arith.constant 0 : index
    %c0_2 = arith.constant 0 : index
    %1 = vector.load %arg0[%c0_1, %c0_2] : memref<8x16xf32, #tpu.memory_space<vmem>>, vector<8x16xf32>
    %c0_3 = arith.constant 0 : index
    %c0_4 = arith.constant 0 : index
    %2 = vector.load %arg2[%c0_3, %c0_4] : memref<104x32xf32, #tpu.memory_space<vmem>>, vector<16x32xf32>
    %c16 = arith.constant 16 : index
    %c0_5 = arith.constant 0 : index
    %3 = vector.load %arg2[%c16, %c0_5] : memref<104x32xf32, #tpu.memory_space<vmem>>, vector<1x32xf32>
    %cst = arith.constant dense<0.000000e+00> : vector<8x32xf32>
    %4 = tpu.matmul %1, %2, %cst {dimension_numbers = #tpu.dot_dimension_numbers<[1], [0], [0], [1], [0, 0, 1, 1], [], []>} : vector<8x16xf32>, vector<16x32xf32>, vector<8x32xf32> -> vector<8x32xf32>
    %cst_6 = arith.constant dense<0.000000e+00> : vector<8x32xf32>
    %5 = tpu.matmul %0, %4, %cst_6 {dimension_numbers = #tpu.dot_dimension_numbers<[1], [0], [0], [1], [0, 0, 1, 1], [], []>} : vector<8x8xf32>, vector<8x32xf32>, vector<8x32xf32> -> vector<8x32xf32>
    %6 = vector.broadcast %3 : vector<1x32xf32> to vector<8x32xf32>
    %7 = arith.addf %5, %6 : vector<8x32xf32>
    %cst_7 = arith.constant 0.000000e+00 : f32
    %8 = vector.broadcast %cst_7 : f32 to vector<8x32xf32>
    %9 = arith.maximumf %7, %8 : vector<8x32xf32>
    %c24 = arith.constant 24 : index
    %c0_8 = arith.constant 0 : index
    %10 = vector.load %arg2[%c24, %c0_8] : memref<104x32xf32, #tpu.memory_space<vmem>>, vector<32x32xf32>
    %c56 = arith.constant 56 : index
    %c0_9 = arith.constant 0 : index
    %11 = vector.load %arg2[%c56, %c0_9] : memref<104x32xf32, #tpu.memory_space<vmem>>, vector<1x32xf32>
    %cst_10 = arith.constant dense<0.000000e+00> : vector<8x32xf32>
    %12 = tpu.matmul %9, %10, %cst_10 {dimension_numbers = #tpu.dot_dimension_numbers<[1], [0], [0], [1], [0, 0, 1, 1], [], []>} : vector<8x32xf32>, vector<32x32xf32>, vector<8x32xf32> -> vector<8x32xf32>
    %cst_11 = arith.constant dense<0.000000e+00> : vector<8x32xf32>
    %13 = tpu.matmul %0, %12, %cst_11 {dimension_numbers = #tpu.dot_dimension_numbers<[1], [0], [0], [1], [0, 0, 1, 1], [], []>} : vector<8x8xf32>, vector<8x32xf32>, vector<8x32xf32> -> vector<8x32xf32>
    %14 = vector.broadcast %11 : vector<1x32xf32> to vector<8x32xf32>
    %15 = arith.addf %13, %14 : vector<8x32xf32>
    %cst_12 = arith.constant 0.000000e+00 : f32
    %16 = vector.broadcast %cst_12 : f32 to vector<8x32xf32>
    %17 = arith.maximumf %15, %16 : vector<8x32xf32>
    %c64 = arith.constant 64 : index
    %c0_13 = arith.constant 0 : index
    %18 = vector.load %arg2[%c64, %c0_13] : memref<104x32xf32, #tpu.memory_space<vmem>>, vector<32x16xf32>
    %c96 = arith.constant 96 : index
    %c0_14 = arith.constant 0 : index
    %19 = vector.load %arg2[%c96, %c0_14] : memref<104x32xf32, #tpu.memory_space<vmem>>, vector<1x16xf32>
    %cst_15 = arith.constant dense<0.000000e+00> : vector<8x16xf32>
    %20 = tpu.matmul %17, %18, %cst_15 {dimension_numbers = #tpu.dot_dimension_numbers<[1], [0], [0], [1], [0, 0, 1, 1], [], []>} : vector<8x32xf32>, vector<32x16xf32>, vector<8x16xf32> -> vector<8x16xf32>
    %cst_16 = arith.constant dense<0.000000e+00> : vector<8x16xf32>
    %21 = tpu.matmul %0, %20, %cst_16 {dimension_numbers = #tpu.dot_dimension_numbers<[1], [0], [0], [1], [0, 0, 1, 1], [], []>} : vector<8x8xf32>, vector<8x16xf32>, vector<8x16xf32> -> vector<8x16xf32>
    %22 = vector.broadcast %19 : vector<1x16xf32> to vector<8x16xf32>
    %23 = arith.addf %21, %22 : vector<8x16xf32>
    %c0_17 = arith.constant 0 : index
    %c0_18 = arith.constant 0 : index
    %24 = vector.load %arg3[%c0_17, %c0_18] : memref<8x16xf32, #tpu.memory_space<vmem>>, vector<8x16xf32>
    tpu.vector_store %arg3[%c0_17, %c0_18], %23 {strides = array<i32>} : memref<8x16xf32, #tpu.memory_space<vmem>>, vector<8x16xf32>,
    return
  }
}

</mosaic_0001>

<llo_original>
// kernel: tpu_custom_call.1
$region0: #{tpu_custom_call.1}
  #allocation0 [shape = 'u32[]', space=smem, size = 0x4, offset = 0x4, fixed_abs, tag = 'smem constant byte address 0x4 - core index']
  #allocation1 [shape = 'u32[72,128]{1,0:T(1,128)}', space=vmem, size = 0x9000, scoped, tag = 'internal scratch']
  %s0 = inlined_call_operand.vmem [shape: f32[8,16], index: 0, kind: input, shape index: {}]
  %s1 = inlined_call_operand.vmem [shape: f32[8,8], index: 1, kind: input, shape index: {}]
  %s2 = inlined_call_operand.vmem [shape: f32[104,32], index: 2, kind: input, shape index: {}]
  %s3 = inlined_call_operand.hbm [shape: f32[8,16], index: 3, kind: output, shape index: {}]
  %s4 = sld [smem:[#allocation0]]
  $region22: #{tpu_custom_call.1} parent=0
    _
  %s6 = ssub.s32 1, %s4
  %s7 = scalar_select 0, %s6, %s4
  $region1: #{tpu_custom_call.1} parent=0
    #allocation2 [shape = 'u8[4096]{0}', space=vmem, size = 0x1000, scoped, tag = 'output window, operand 0, single buffered']
    #allocation3 [shape = 's32[1]{0}', space=sflag, size = 0x4, scoped, tag = 'scoped memory for tpu_custom_call.1']
    %8 = vsyncpa [#allocation3], 0
    // Predicated region
    $region2: #{tpu_custom_call.1} parent=1 // pred_check
      _
    $region3: #{tpu_custom_call.1} parent=1 // pred_check_branch
      %10 = sbr.rel (0) target = $region5
    $region4: #{tpu_custom_call.1} parent=1 // pred_region
      _
    $region5: #{tpu_custom_call.1} parent=1 // pred_fallthru
      _
    // Predicated region
    $region6: #{tpu_custom_call.1} parent=1 // pred_check
      _
    $region7: #{tpu_custom_call.1} parent=1 // pred_check_branch
      %12 = sbr.rel (0) target = $region9
    $region8: #{tpu_custom_call.1} parent=1 // pred_region
      _
    $region9: #{tpu_custom_call.1} parent=1 // pred_fallthru
      _
    // Predicated region
    $region10: #{tpu_custom_call.1} parent=1 // pred_check
      _
    $region11: #{tpu_custom_call.1} parent=1 // pred_check_branch
      %14 = sbr.rel (0) target = $region13
    $region12: #{tpu_custom_call.1} parent=1 // pred_region
      _
    $region13: #{tpu_custom_call.1} parent=1 // pred_fallthru
      _
    %v15 = vld [vmem:[%s1] sm:$0xff]
    %v16 = vld [vmem:[%s0] sm:$0xff]
    %v17 = vld [vmem:[%s2] sm:$0xff]
    %v18 = vld [vmem:[%s2 + $0x8] sm:$0xff]
    %v19 = vld [vmem:[%s2 + $0x10] sm:$0x1]
    %vm20 = vcmask 130048
    %v22 = vsel %vm20, %v16, 0
    %24 = vmatpush.msra.mxu0 0.0
    %25 = vmatpush.msra.mxu0 0.0
    %26 = vmatpush.msra.mxu0 0.0
    %27 = vmatpush.msra.mxu0 0.0
    %28 = vmatpush.msra.mxu0 0.0
    %29 = vmatpush.msra.mxu0 0.0
    %30 = vmatpush.msra.mxu0 0.0
    %31 = vmatpush.msra.mxu0 0.0
    %32 = vmatpush.msra.mxu0 0.0
    %33 = vmatpush.msra.mxu0 0.0
    %34 = vmatpush.msra.mxu0 0.0
    %35 = vmatpush.msra.mxu0 0.0
    %36 = vmatpush.msra.mxu0 0.0
    %37 = vmatpush.msra.mxu0 0.0
    %38 = vmatpush.msra.mxu0 %v18
    %39 = vmatpush.msra.mxu0 %v17
    %40 = vmatmul.f32.gmra.mxu0 %v22
    %v41 = vpop.f32.mrf.mxu0
    %v42 = vadd.f32 0.0, %v41
    %43 = vdwg.mxu0
    %v44 = vperm.slane %v19, 0
    %vm45 = vcmask 64512
    %v47 = vsel %vm45, %v15, 0
    %49 = vmatpush.msra.mxu0 0.0
    %50 = vmatpush.msra.mxu0 0.0
    %51 = vmatpush.msra.mxu0 0.0
    %52 = vmatpush.msra.mxu0 0.0
    %53 = vmatpush.msra.mxu0 0.0
    %54 = vmatpush.msra.mxu0 0.0
    %55 = vmatpush.msra.mxu0 0.0
    %56 = vmatpush.msra.mxu0 0.0
    %57 = vmatpush.msra.mxu0 0.0
    %58 = vmatpush.msra.mxu0 0.0
    %59 = vmatpush.msra.mxu0 0.0
    %60 = vmatpush.msra.mxu0 0.0
    %61 = vmatpush.msra.mxu0 0.0
    %62 = vmatpush.msra.mxu0 0.0
    %63 = vmatpush.msra.mxu0 0.0
    %64 = vmatpush.msra.mxu0 %v42
    %65 = vmatmul.f32.gmra.mxu0 %v47
    %v66 = vpop.f32.mrf.mxu0
    %v67 = vadd.f32 %v44, %v66
    %68 = vdwg.mxu0
    %v69 = vmax.f32 %v67, 0.0
    %v70 = vld [vmem:[%s2 + $0x18] sm:$0xff]
    %v71 = vld [vmem:[%s2 + $0x20] sm:$0xff]
    %v72 = vld [vmem:[%s2 + $0x28] sm:$0xff]
    %v73 = vld [vmem:[%s2 + $0x30] sm:$0xff]
    %v74 = vld [vmem:[%s2 + $0x38] sm:$0x1]
    %vm75 = vcmask 261120
    %v77 = vsel %vm75, %v69, 0
    %79 = vmatpush.msra.mxu0 0.0
    %80 = vmatpush.msra.mxu0 0.0
    %81 = vmatpush.msra.mxu0 0.0
    %82 = vmatpush.msra.mxu0 0.0
    %83 = vmatpush.msra.mxu0 0.0
    %84 = vmatpush.msra.mxu0 0.0
    %85 = vmatpush.msra.mxu0 0.0
    %86 = vmatpush.msra.mxu0 0.0
    %87 = vmatpush.msra.mxu0 0.0
    %88 = vmatpush.msra.mxu0 0.0
    %89 = vmatpush.msra.mxu0 0.0
    %90 = vmatpush.msra.mxu0 0.0
    %91 = vmatpush.msra.mxu0 %v73
    %92 = vmatpush.msra.mxu0 %v72
    %93 = vmatpush.msra.mxu0 %v71
    %94 = vmatpush.msra.mxu0 %v70
    %95 = vmatmul.f32.gmra.mxu0 %v77
    %v96 = vpop.f32.mrf.mxu0
    %v97 = vadd.f32 0.0, %v96
    %98 = vdwg.mxu0
    %v99 = vperm.slane %v74, 0
    %100 = vmatpush.msra.mxu0 0.0
    %101 = vmatpush.msra.mxu0 0.0
    %102 = vmatpush.msra.mxu0 0.0
    %103 = vmatpush.msra.mxu0 0.0
    %104 = vmatpush.msra.mxu0 0.0
    %105 = vmatpush.msra.mxu0 0.0
    %106 = vmatpush.msra.mxu0 0.0
    %107 = vmatpush.msra.mxu0 0.0
    %108 = vmatpush.msra.mxu0 0.0
    %109 = vmatpush.msra.mxu0 0.0
    %110 = vmatpush.msra.mxu0 0.0
    %111 = vmatpush.msra.mxu0 0.0
    %112 = vmatpush.msra.mxu0 0.0
    %113 = vmatpush.msra.mxu0 0.0
    %114 = vmatpush.msra.mxu0 0.0
    %115 = vmatpush.msra.mxu0 %v97
    %116 = vmatmul.f32.gmra.mxu0 %v47
    %v117 = vpop.f32.mrf.mxu0
    %v118 = vadd.f32 %v99, %v117
    %119 = vdwg.mxu0
    %v120 = vmax.f32 %v118, 0.0
    %v121 = vld [vmem:[%s2 + $0x40] sm:$0xff]
    %v122 = vld [vmem:[%s2 + $0x48] sm:$0xff]
    %v123 = vld [vmem:[%s2 + $0x50] sm:$0xff]
    %v124 = vld [vmem:[%s2 + $0x58] sm:$0xff]
    %v125 = vld [vmem:[%s2 + $0x60] sm:$0x1]
    %v127 = vsel %vm75, %v120, 0
    %129 = vmatpush.msra.mxu0 0.0
    %130 = vmatpush.msra.mxu0 0.0
    %131 = vmatpush.msra.mxu0 0.0
    %132 = vmatpush.msra.mxu0 0.0
    %133 = vmatpush.msra.mxu0 0.0
    %134 = vmatpush.msra.mxu0 0.0
    %135 = vmatpush.msra.mxu0 0.0
    %136 = vmatpush.msra.mxu0 0.0
    %137 = vmatpush.msra.mxu0 0.0
    %138 = vmatpush.msra.mxu0 0.0
    %139 = vmatpush.msra.mxu0 0.0
    %140 = vmatpush.msra.mxu0 0.0
    %141 = vmatpush.msra.mxu0 %v124
    %142 = vmatpush.msra.mxu0 %v123
    %143 = vmatpush.msra.mxu0 %v122
    %144 = vmatpush.msra.mxu0 %v121
    %145 = vmatmul.f32.gmra.mxu0 %v127
    %v146 = vpop.f32.mrf.mxu0
    %v147 = vadd.f32 0.0, %v146
    %148 = vdwg.mxu0
    %v149 = vperm.slane %v125, 0
    %150 = vmatpush.msra.mxu0 0.0
    %151 = vmatpush.msra.mxu0 0.0
    %152 = vmatpush.msra.mxu0 0.0
    %153 = vmatpush.msra.mxu0 0.0
    %154 = vmatpush.msra.mxu0 0.0
    %155 = vmatpush.msra.mxu0 0.0
    %156 = vmatpush.msra.mxu0 0.0
    %157 = vmatpush.msra.mxu0 0.0
    %158 = vmatpush.msra.mxu0 0.0
    %159 = vmatpush.msra.mxu0 0.0
    %160 = vmatpush.msra.mxu0 0.0
    %161 = vmatpush.msra.mxu0 0.0
    %162 = vmatpush.msra.mxu0 0.0
    %163 = vmatpush.msra.mxu0 0.0
    %164 = vmatpush.msra.mxu0 0.0
    %165 = vmatpush.msra.mxu0 %v147
    %166 = vmatmul.f32.gmra.mxu0 %v47
    %v167 = vpop.f32.mrf.mxu0
    %v168 = vadd.f32 %v149, %v167
    %169 = vdwg.mxu0
    %170 = vst.msk [vmem:[#allocation2] sm:$0xff] %vm20, %v168
    // Predicated region
    $region14: #{tpu_custom_call.1} parent=1 // pred_check
      _
    $region15: #{tpu_custom_call.1} parent=1 // pred_check_branch
      %172 = sbr.rel (0) target = $region17
    $region16: #{tpu_custom_call.1} parent=1 // pred_region
      %174 = vsyncadd [#allocation3], 0
      %s176 = sshll.u32 [#allocation2], 4
      %s177 = int_to_ptr.vmem [resolvable:$true] %s176
      %s178 = sshll.u32 %s3, 4
      %s179 = int_to_ptr.hbm [resolvable:$true] %s178
      %181 = dma.vmem_to_hbm [thread:$0]  %s177, 128, %s179, [#allocation3]
    $region17: #{tpu_custom_call.1} parent=1 // pred_fallthru
      _
    // Predicated region
    $region18: #{tpu_custom_call.1} parent=1 // pred_check
      _
    $region19: #{tpu_custom_call.1} parent=1 // pred_check_branch
      %183 = sbr.rel (0) target = $region21
    $region20: #{tpu_custom_call.1} parent=1 // pred_region
      %185 = dma.done [#allocation3], 128
    $region21: #{tpu_custom_call.1} parent=1 // pred_fallthru
      _
    %186 = vsyncpa [#allocation3], 1

</llo_original>
